<compile_context>
chip_gen: v7x
topology: tpu7x:2x2x1
jax: 0.10.0
libtpu: 0.0.40
codegen_flags: <defaults>
</compile_context>

<pallas_src>
import jax
import jax.numpy as jnp
from jax.experimental import pallas as pl
from jax.experimental.pallas import tpu as pltpu

H, W = 5, 5          # input spatial size (fixed by the module's reshape)
K, S = 3, 3          # kernel_size=3, stride defaults to kernel_size
OH, OW = 2, 2        # ceil_mode=True output size: ceil((5-3)/3)+1 = 2

# Flattened (row-major, idx = r*5 + c) input rows feeding each output cell.
# Output cell order is row-major (oh, ow): (0,0), (0,1), (1,0), (1,1).
# ceil_mode=True => the second window in each dim is the partial 3:5 slice.
_WINDOWS = (
    (0, 1, 2, 5, 6, 7, 10, 11, 12),   # (0,0): rows 0..2, cols 0..2
    (3, 4, 8, 9, 13, 14),             # (0,1): rows 0..2, cols 3..4
    (15, 16, 17, 20, 21, 22),         # (1,0): rows 3..4, cols 0..2
    (18, 19, 23, 24),                 # (1,1): rows 3..4, cols 3..4
)


def maxpool_kernel(x_ref, o_ref):
    # x_ref: (25, TN) VMEM block; o_ref: (4, TN) VMEM block.
    # Each window = chained elementwise maximum of sublane rows (VPU only).
    for w, idxs in enumerate(_WINDOWS):
        i0 = idxs[0]
        m = x_ref[i0:i0 + 1, :]
        for i in idxs[1:]:
            m = jnp.maximum(m, x_ref[i:i + 1, :])
        o_ref[w:w + 1, :] = m


def maxpool2d_ceil(x):
    """x: (N, 1, 5, 5) -> (N, 1, 2, 2), MaxPool2d(3, stride=3, ceil_mode=True)."""
    n, c, h, w = x.shape
    assert (c, h, w) == (1, H, W), (c, h, w)
    dtype = x.dtype

    # Lane-dense layout: (N, 25) -> (25, N) so batch sits on the lane axis.
    x2 = x.reshape(n, H * W).T                    # (25, N)

    # Block width: multiple of 128 lanes; ~800 KiB per input block at 8192.
    if n >= 8192:
        tn = 8192
    else:
        tn = max(128, ((n + 127) // 128) * 128)
    n_pad = ((n + tn - 1) // tn) * tn
    if n_pad != n:
        x2 = jnp.pad(x2, ((0, 0), (0, n_pad - n)))  # pad batch tail; sliced off below

    out = pl.pallas_call(
        maxpool_kernel,
        out_shape=jax.ShapeDtypeStruct((OH * OW, n_pad), dtype),
        grid_spec=pltpu.PrefetchScalarGridSpec(
            num_scalar_prefetch=0,
            grid=(n_pad // tn,),
            in_specs=[pl.BlockSpec((H * W, tn), lambda i: (0, i))],
            out_specs=pl.BlockSpec((OH * OW, tn), lambda i: (0, i)),
        ),
        compiler_params=pltpu.CompilerParams(
            dimension_semantics=("parallel",),
        ),
    )(x2)

    out = out[:, :n]                              # (4, N) drop batch padding
    return out.T.reshape(n, 1, OH, OW)            # back to NCHW


class Test:
    """Mirror of the PyTorch Test module (MaxPool2d(3, ceil_mode=True))."""

    def __call__(self, x):
        return maxpool2d_ceil(x)


if __name__ == "__main__":
    key = jax.random.PRNGKey(0)
    # Same semantics as torch.reshape(input, (-1, 1, 5, 5)); pick batch=2.
    x = jax.random.normal(key, (2 * 1 * 5 * 5,), dtype=jnp.float32)
    x = jnp.reshape(x, (-1, 1, 5, 5))

    test = Test()
    out = test(x)
    out = jax.block_until_ready(out)

    # Pure-JAX reference of MaxPool2d(3, stride=3, ceil_mode=True) on 5x5.
    ref = jnp.stack(
        [
            jnp.stack(
                [
                    jnp.max(x[:, :, oh * 3:min(oh * 3 + 3, 5),
                              ow * 3:min(ow * 3 + 3, 5)], axis=(2, 3))
                    for ow in range(2)
                ],
                axis=-1,
            )
            for oh in range(2)
        ],
        axis=-2,
    )

    assert out.shape == (2, 1, 2, 2), out.shape
    assert jnp.allclose(out, ref), "mismatch vs reference"
    print("KERNEL_OK")
</pallas_src>

<mosaic_0001>
module attributes {stable_mosaic.version = 11 : i64} {
  func.func @maxpool_kernel(%arg0: i32, %arg1: memref<25x128xf32, #tpu.memory_space<vmem>>, %arg2: memref<4x128xf32, #tpu.memory_space<vmem>>) attributes {dimension_semantics = [#tpu.dimension_semantics<parallel>], iteration_bounds = array<i64: 1>, scalar_prefetch = 0 : i64, scratch_operands = 0 : i64, tpu.core_type = #tpu.core_type<tc>, window_params = [{transform_indices = @transform_0, window_bounds = array<i64: 25, 128>}, {transform_indices = @transform_1, window_bounds = array<i64: 4, 128>}]} {
    %c0 = arith.constant 0 : index
    %c0_0 = arith.constant 0 : index
    %0 = vector.load %arg1[%c0, %c0_0] : memref<25x128xf32, #tpu.memory_space<vmem>>, vector<1x128xf32>
    %c1 = arith.constant 1 : index
    %c0_1 = arith.constant 0 : index
    %1 = vector.load %arg1[%c1, %c0_1] : memref<25x128xf32, #tpu.memory_space<vmem>>, vector<1x128xf32>
    %2 = arith.maximumf %0, %1 : vector<1x128xf32>
    %c2 = arith.constant 2 : index
    %c0_2 = arith.constant 0 : index
    %3 = vector.load %arg1[%c2, %c0_2] : memref<25x128xf32, #tpu.memory_space<vmem>>, vector<1x128xf32>
    %4 = arith.maximumf %2, %3 : vector<1x128xf32>
    %c5 = arith.constant 5 : index
    %c0_3 = arith.constant 0 : index
    %5 = vector.load %arg1[%c5, %c0_3] : memref<25x128xf32, #tpu.memory_space<vmem>>, vector<1x128xf32>
    %6 = arith.maximumf %4, %5 : vector<1x128xf32>
    %c6 = arith.constant 6 : index
    %c0_4 = arith.constant 0 : index
    %7 = vector.load %arg1[%c6, %c0_4] : memref<25x128xf32, #tpu.memory_space<vmem>>, vector<1x128xf32>
    %8 = arith.maximumf %6, %7 : vector<1x128xf32>
    %c7 = arith.constant 7 : index
    %c0_5 = arith.constant 0 : index
    %9 = vector.load %arg1[%c7, %c0_5] : memref<25x128xf32, #tpu.memory_space<vmem>>, vector<1x128xf32>
    %10 = arith.maximumf %8, %9 : vector<1x128xf32>
    %c10 = arith.constant 10 : index
    %c0_6 = arith.constant 0 : index
    %11 = vector.load %arg1[%c10, %c0_6] : memref<25x128xf32, #tpu.memory_space<vmem>>, vector<1x128xf32>
    %12 = arith.maximumf %10, %11 : vector<1x128xf32>
    %c11 = arith.constant 11 : index
    %c0_7 = arith.constant 0 : index
    %13 = vector.load %arg1[%c11, %c0_7] : memref<25x128xf32, #tpu.memory_space<vmem>>, vector<1x128xf32>
    %14 = arith.maximumf %12, %13 : vector<1x128xf32>
    %c12 = arith.constant 12 : index
    %c0_8 = arith.constant 0 : index
    %15 = vector.load %arg1[%c12, %c0_8] : memref<25x128xf32, #tpu.memory_space<vmem>>, vector<1x128xf32>
    %16 = arith.maximumf %14, %15 : vector<1x128xf32>
    %c0_9 = arith.constant 0 : index
    %c0_10 = arith.constant 0 : index
    %17 = vector.load %arg2[%c0_9, %c0_10] : memref<4x128xf32, #tpu.memory_space<vmem>>, vector<1x128xf32>
    tpu.vector_store %arg2[%c0_9, %c0_10], %16 {strides = array<i32>} : memref<4x128xf32, #tpu.memory_space<vmem>>, vector<1x128xf32>,
    %c3 = arith.constant 3 : index
    %c0_11 = arith.constant 0 : index
    %18 = vector.load %arg1[%c3, %c0_11] : memref<25x128xf32, #tpu.memory_space<vmem>>, vector<1x128xf32>
    %c4 = arith.constant 4 : index
    %c0_12 = arith.constant 0 : index
    %19 = vector.load %arg1[%c4, %c0_12] : memref<25x128xf32, #tpu.memory_space<vmem>>, vector<1x128xf32>
    %20 = arith.maximumf %18, %19 : vector<1x128xf32>
    %c8 = arith.constant 8 : index
    %c0_13 = arith.constant 0 : index
    %21 = vector.load %arg1[%c8, %c0_13] : memref<25x128xf32, #tpu.memory_space<vmem>>, vector<1x128xf32>
    %22 = arith.maximumf %20, %21 : vector<1x128xf32>
    %c9 = arith.constant 9 : index
    %c0_14 = arith.constant 0 : index
    %23 = vector.load %arg1[%c9, %c0_14] : memref<25x128xf32, #tpu.memory_space<vmem>>, vector<1x128xf32>
    %24 = arith.maximumf %22, %23 : vector<1x128xf32>
    %c13 = arith.constant 13 : index
    %c0_15 = arith.constant 0 : index
    %25 = vector.load %arg1[%c13, %c0_15] : memref<25x128xf32, #tpu.memory_space<vmem>>, vector<1x128xf32>
    %26 = arith.maximumf %24, %25 : vector<1x128xf32>
    %c14 = arith.constant 14 : index
    %c0_16 = arith.constant 0 : index
    %27 = vector.load %arg1[%c14, %c0_16] : memref<25x128xf32, #tpu.memory_space<vmem>>, vector<1x128xf32>
    %28 = arith.maximumf %26, %27 : vector<1x128xf32>
    %c1_17 = arith.constant 1 : index
    %c0_18 = arith.constant 0 : index
    %29 = vector.load %arg2[%c1_17, %c0_18] : memref<4x128xf32, #tpu.memory_space<vmem>>, vector<1x128xf32>
    tpu.vector_store %arg2[%c1_17, %c0_18], %28 {strides = array<i32>} : memref<4x128xf32, #tpu.memory_space<vmem>>, vector<1x128xf32>,
    %c15 = arith.constant 15 : index
    %c0_19 = arith.constant 0 : index
    %30 = vector.load %arg1[%c15, %c0_19] : memref<25x128xf32, #tpu.memory_space<vmem>>, vector<1x128xf32>
    %c16 = arith.constant 16 : index
    %c0_20 = arith.constant 0 : index
    %31 = vector.load %arg1[%c16, %c0_20] : memref<25x128xf32, #tpu.memory_space<vmem>>, vector<1x128xf32>
    %32 = arith.maximumf %30, %31 : vector<1x128xf32>
    %c17 = arith.constant 17 : index
    %c0_21 = arith.constant 0 : index
    %33 = vector.load %arg1[%c17, %c0_21] : memref<25x128xf32, #tpu.memory_space<vmem>>, vector<1x128xf32>
    %34 = arith.maximumf %32, %33 : vector<1x128xf32>
    %c20 = arith.constant 20 : index
    %c0_22 = arith.constant 0 : index
    %35 = vector.load %arg1[%c20, %c0_22] : memref<25x128xf32, #tpu.memory_space<vmem>>, vector<1x128xf32>
    %36 = arith.maximumf %34, %35 : vector<1x128xf32>
    %c21 = arith.constant 21 : index
    %c0_23 = arith.constant 0 : index
    %37 = vector.load %arg1[%c21, %c0_23] : memref<25x128xf32, #tpu.memory_space<vmem>>, vector<1x128xf32>
    %38 = arith.maximumf %36, %37 : vector<1x128xf32>
    %c22 = arith.constant 22 : index
    %c0_24 = arith.constant 0 : index
    %39 = vector.load %arg1[%c22, %c0_24] : memref<25x128xf32, #tpu.memory_space<vmem>>, vector<1x128xf32>
    %40 = arith.maximumf %38, %39 : vector<1x128xf32>
    %c2_25 = arith.constant 2 : index
    %c0_26 = arith.constant 0 : index
    %41 = vector.load %arg2[%c2_25, %c0_26] : memref<4x128xf32, #tpu.memory_space<vmem>>, vector<1x128xf32>
    tpu.vector_store %arg2[%c2_25, %c0_26], %40 {strides = array<i32>} : memref<4x128xf32, #tpu.memory_space<vmem>>, vector<1x128xf32>,
    %c18 = arith.constant 18 : index
    %c0_27 = arith.constant 0 : index
    %42 = vector.load %arg1[%c18, %c0_27] : memref<25x128xf32, #tpu.memory_space<vmem>>, vector<1x128xf32>
    %c19 = arith.constant 19 : index
    %c0_28 = arith.constant 0 : index
    %43 = vector.load %arg1[%c19, %c0_28] : memref<25x128xf32, #tpu.memory_space<vmem>>, vector<1x128xf32>
    %44 = arith.maximumf %42, %43 : vector<1x128xf32>
    %c23 = arith.constant 23 : index
    %c0_29 = arith.constant 0 : index
    %45 = vector.load %arg1[%c23, %c0_29] : memref<25x128xf32, #tpu.memory_space<vmem>>, vector<1x128xf32>
    %46 = arith.maximumf %44, %45 : vector<1x128xf32>
    %c24 = arith.constant 24 : index
    %c0_30 = arith.constant 0 : index
    %47 = vector.load %arg1[%c24, %c0_30] : memref<25x128xf32, #tpu.memory_space<vmem>>, vector<1x128xf32>
    %48 = arith.maximumf %46, %47 : vector<1x128xf32>
    %c3_31 = arith.constant 3 : index
    %c0_32 = arith.constant 0 : index
    %49 = vector.load %arg2[%c3_31, %c0_32] : memref<4x128xf32, #tpu.memory_space<vmem>>, vector<1x128xf32>
    tpu.vector_store %arg2[%c3_31, %c0_32], %48 {strides = array<i32>} : memref<4x128xf32, #tpu.memory_space<vmem>>, vector<1x128xf32>,
    return
  }
  func.func @transform_0(%arg0: i32) -> (i32, i32) {
    %c0_i32 = arith.constant 0 : i32
    %c0_i32_0 = arith.constant 0 : i32
    return %c0_i32, %arg0 : i32, i32
  }
  func.func @transform_1(%arg0: i32) -> (i32, i32) {
    %c0_i32 = arith.constant 0 : i32
    %c0_i32_0 = arith.constant 0 : i32
    return %c0_i32, %arg0 : i32, i32
  }
}

</mosaic_0001>

<llo_original>
// kernel: tpu_custom_call.1
$region0: #{tpu_custom_call.1}
  #allocation0 [shape = 'u32[]', space=smem, size = 0x4, offset = 0x4, fixed_abs, tag = 'smem constant byte address 0x4 - core index']
  #allocation1 [shape = 'u32[144,128]{1,0:T(1,128)}', space=vmem, size = 0x12000, scoped, tag = 'internal scratch']
  %s0 = inlined_call_operand.hbm [shape: f32[25,128], index: 0, kind: input, shape index: {}]
  %s1 = inlined_call_operand.hbm [shape: f32[4,128], index: 1, kind: output, shape index: {}]
  %s2 = sld [smem:[#allocation0]]
  $region18: #{tpu_custom_call.1} parent=0
    _
  %s4 = ssub.s32 1, %s2
  %s5 = scalar_select 0, %s4, %s2
  $region1: #{tpu_custom_call.1} parent=0
    #allocation2 [shape = 'u8[16384]{0}', space=vmem, size = 0x4000, scoped, tag = 'input window, operand 0, single buffered']
    #allocation3 [shape = 's32[1]{0}', space=sflag, size = 0x4, scoped, tag = 'scoped memory for tpu_custom_call.1']
    #allocation4 [shape = 's32[1]{0}', space=sflag, size = 0x4, scoped, tag = 'scoped memory for tpu_custom_call.1']
    #allocation5 [shape = 'u8[2048]{0}', space=vmem, size = 0x800, scoped, tag = 'output window, operand 0, single buffered']
    %6 = vsyncpa [#allocation3], 0
    %7 = vsyncpa [#allocation4], 0
    // Predicated region
    $region2: #{tpu_custom_call.1} parent=1 // pred_check
      _
    $region3: #{tpu_custom_call.1} parent=1 // pred_check_branch
      %9 = sbr.rel (0) target = $region5
    $region4: #{tpu_custom_call.1} parent=1 // pred_region
      %s11 = ssub.s32 512, 512
      %12 = vsyncadd [#allocation3], %s11
      %s13 = sshll.u32 [#allocation2], 4
      %s14 = int_to_ptr.vmem [resolvable:$true] %s13
      %19 = dma.hbm_to_vmem [thread:$0]  %s0, 512, %s14, [#allocation3], 128, 128, 8
    $region5: #{tpu_custom_call.1} parent=1 // pred_fallthru
      _
    // Predicated region
    $region6: #{tpu_custom_call.1} parent=1 // pred_check
      _
    $region7: #{tpu_custom_call.1} parent=1 // pred_check_branch
      %21 = sbr.rel (0) target = $region9
    $region8: #{tpu_custom_call.1} parent=1 // pred_region
      %22 = dma.done [#allocation3], 512
    $region9: #{tpu_custom_call.1} parent=1 // pred_fallthru
      _
    %v23 = vld [vmem:[#allocation2] sm:$0x1]
    %v24 = vld [vmem:[#allocation2 + $0x1] sm:$0x1]
    %v25 = vmax.f32 %v23, %v24
    %v26 = vld [vmem:[#allocation2 + $0x2] sm:$0x1]
    %v27 = vmax.f32 %v25, %v26
    %v28 = vld [vmem:[#allocation2 + $0x5] sm:$0x1]
    %v29 = vmax.f32 %v27, %v28
    %v30 = vld [vmem:[#allocation2 + $0x6] sm:$0x1]
    %v31 = vmax.f32 %v29, %v30
    %v32 = vld [vmem:[#allocation2 + $0x7] sm:$0x1]
    %v33 = vmax.f32 %v31, %v32
    %v34 = vld [vmem:[#allocation2 + $0xa] sm:$0x1]
    %v35 = vmax.f32 %v33, %v34
    %v36 = vld [vmem:[#allocation2 + $0xb] sm:$0x1]
    %v37 = vmax.f32 %v35, %v36
    %v38 = vld [vmem:[#allocation2 + $0xc] sm:$0x1]
    %v39 = vmax.f32 %v37, %v38
    %40 = vst [vmem:[#allocation5] sm:$0x1] %v39
    %v41 = vld [vmem:[#allocation2 + $0x3] sm:$0x1]
    %v42 = vld [vmem:[#allocation2 + $0x4] sm:$0x1]
    %v43 = vmax.f32 %v41, %v42
    %v44 = vld [vmem:[#allocation2 + $0x8] sm:$0x1]
    %v45 = vmax.f32 %v43, %v44
    %v46 = vld [vmem:[#allocation2 + $0x9] sm:$0x1]
    %v47 = vmax.f32 %v45, %v46
    %v48 = vld [vmem:[#allocation2 + $0xd] sm:$0x1]
    %v49 = vmax.f32 %v47, %v48
    %v50 = vld [vmem:[#allocation2 + $0xe] sm:$0x1]
    %v51 = vmax.f32 %v49, %v50
    %52 = vst [vmem:[#allocation5 + $0x1] sm:$0x1] %v51
    %v53 = vld [vmem:[#allocation2 + $0xf] sm:$0x1]
    %v54 = vld [vmem:[#allocation2 + $0x10] sm:$0x1]
    %v55 = vmax.f32 %v53, %v54
    %v56 = vld [vmem:[#allocation2 + $0x11] sm:$0x1]
    %v57 = vmax.f32 %v55, %v56
    %v58 = vld [vmem:[#allocation2 + $0x14] sm:$0x1]
    %v59 = vmax.f32 %v57, %v58
    %v60 = vld [vmem:[#allocation2 + $0x15] sm:$0x1]
    %v61 = vmax.f32 %v59, %v60
    %v62 = vld [vmem:[#allocation2 + $0x16] sm:$0x1]
    %v63 = vmax.f32 %v61, %v62
    %64 = vst [vmem:[#allocation5 + $0x2] sm:$0x1] %v63
    %v65 = vld [vmem:[#allocation2 + $0x12] sm:$0x1]
    %v66 = vld [vmem:[#allocation2 + $0x13] sm:$0x1]
    %v67 = vmax.f32 %v65, %v66
    %v68 = vld [vmem:[#allocation2 + $0x17] sm:$0x1]
    %v69 = vmax.f32 %v67, %v68
    %v70 = vld [vmem:[#allocation2 + $0x18] sm:$0x1]
    %v71 = vmax.f32 %v69, %v70
    %72 = vst [vmem:[#allocation5 + $0x3] sm:$0x1] %v71
    // Predicated region
    $region10: #{tpu_custom_call.1} parent=1 // pred_check
      _
    $region11: #{tpu_custom_call.1} parent=1 // pred_check_branch
      %74 = sbr.rel (0) target = $region13
    $region12: #{tpu_custom_call.1} parent=1 // pred_region
      %s76 = ssub.s32 64, 64
      %77 = vsyncadd [#allocation4], %s76
      %s79 = sshll.u32 [#allocation5], 4
      %s80 = int_to_ptr.vmem [resolvable:$true] %s79
      %82 = dma.vmem_to_hbm [thread:$0]  %s80, 64, %s1, [#allocation4]
    $region13: #{tpu_custom_call.1} parent=1 // pred_fallthru
      _
    // Predicated region
    $region14: #{tpu_custom_call.1} parent=1 // pred_check
      _
    $region15: #{tpu_custom_call.1} parent=1 // pred_check_branch
      %84 = sbr.rel (0) target = $region17
    $region16: #{tpu_custom_call.1} parent=1 // pred_region
      %85 = dma.done [#allocation4], 64
    $region17: #{tpu_custom_call.1} parent=1 // pred_fallthru
      _
    %86 = vsyncpa [#allocation3], 1
    %87 = vsyncpa [#allocation4], 1

</llo_original>
